<compile_context>
chip_gen: v7x
topology: tpu7x:2x2x1
jax: 0.10.0
libtpu: 0.0.40
codegen_flags: <defaults>
</compile_context>

<pallas_src>
import functools

import jax
import jax.numpy as jnp
from jax.experimental import pallas as pl
from jax.experimental.pallas import tpu as pltpu

NUM_CLASSES = 702          # hard-coded in the PyTorch module


def _complement_entropy_kernel(yhat_ref, y_ref, out_ref, *, n_valid_rows):
    i = pl.program_id(0)

    logits = yhat_ref[...].astype(jnp.float32)             # (TB, C) f32
    tb, n_cls = logits.shape
    labels = y_ref[...]                                     # (TB, 1) i32

    # --- softmax pieces: one exp per element, reductions per row -----------
    m = jnp.max(logits, axis=-1, keepdims=True)             # (TB, 1)  XLU
    shifted = logits - m                                    # (TB, C)  VPU
    e = jnp.exp(shifted)                                    # (TB, C)  EUP
    s = jnp.sum(e, axis=-1, keepdims=True)                  # (TB, 1)  XLU

    # --- gather exp at label column via one-hot compare (lane gather) ------
    col = jax.lax.broadcasted_iota(jnp.int32, (tb, n_cls), 1)
    onehot = col == labels                                  # (TB, C)
    eg = jnp.sum(jnp.where(onehot, e, 0.0), axis=-1, keepdims=True)  # (TB,1)

    # --- weighted log-space sum: t = sum_j e_j * shifted_j ------------------
    t = jnp.sum(e * shifted, axis=-1, keepdims=True)        # (TB, 1)

    # --- per-row scalars ----------------------------------------------------
    inv_s = pl.reciprocal(s, approx=False)                  # (TB, 1)
    yg = eg * inv_s                                         # softmax prob at y
    yg_ = 1.0 - yg + 1e-7
    inv_yg_ = pl.reciprocal(yg_, approx=False)
    scale = inv_s * inv_yg_                                 # Px_j = e_j * scale
    logrow = jnp.log(s) + jnp.log(yg_)                      # log(Px)=shifted-logrow

    # Label column's e*shifted term; shifted_y == log(eg).  Guard eg == 0
    # (exp underflow) with a select so 0 * (-inf) never produces NaN.
    eg_term = jnp.where(eg > 0.0, eg * jnp.log(eg), 0.0)

    # sum_{j != y} Px_j * log(Px_j), all per-row from here on.
    row_sum = scale * (t - eg_term) - logrow * (1.0 - yg) * inv_yg_

    # --- zero out padded rows of a partial last tile (select, NaN-safe) ----
    row = jax.lax.broadcasted_iota(jnp.int32, (tb, 1), 0)
    row_valid = (row + i * tb) < n_valid_rows               # (TB, 1) bool
    out_ref[...] = jnp.where(row_valid, row_sum, 0.0)


def _round_up(x, m):
    return ((x + m - 1) // m) * m


def complement_entropy(yhat, y, *, block_rows=512):
    """yhat: [B, 702] float32/bfloat16 logits, y: [B] int labels -> scalar loss."""
    B, C = yhat.shape
    assert C == NUM_CLASSES, "module hard-codes 702 classes"

    # Cap the tile so the 1-D parallel grid has >= 2 steps whenever B allows
    # (both TensorCores on v7x get work); keep rows a multiple of 8.
    tb = min(_round_up(block_rows, 8), _round_up(-(-B // 2), 8))
    tb = max(tb, 8)
    num_tiles = -(-B // tb)
    bp = num_tiles * tb

    # Only the tiny int32 label column is padded; the logits array is passed
    # at its native shape (no full-array pad/copy in HBM).
    y_col = jnp.zeros((bp, 1), dtype=jnp.int32).at[:B, 0].set(y.astype(jnp.int32))

    kernel = functools.partial(_complement_entropy_kernel, n_valid_rows=B)

    itemsize = jnp.dtype(yhat.dtype).itemsize
    cost = pl.CostEstimate(
        flops=10 * B * C,
        transcendentals=B * C,
        bytes_accessed=B * C * itemsize + 2 * bp * 4,
    )

    partials = pl.pallas_call(
        kernel,
        out_shape=jax.ShapeDtypeStruct((bp, 1), jnp.float32),
        grid=(num_tiles,),
        in_specs=[
            # logits tile: last dim = full array dim (702), rows tiled.
            pl.BlockSpec((tb, C), lambda i: (i, 0)),
            # labels: per-tile block (VMEM use independent of total B).
            pl.BlockSpec((tb, 1), lambda i: (i, 0)),
        ],
        out_specs=pl.BlockSpec((tb, 1), lambda i: (i, 0)),
        compiler_params=pltpu.CompilerParams(
            dimension_semantics=("parallel",)),   # megacore-shardable
        cost_estimate=cost,
    )(yhat, y_col)

    return jnp.sum(partials) / (float(B) * float(NUM_CLASSES))


def _reference(yhat, y):
    B, C = yhat.shape
    p = jax.nn.softmax(yhat.astype(jnp.float32), axis=1)
    Yg = jnp.take_along_axis(p, y[:, None], axis=1)        # (B, 1)
    Yg_ = 1.0 - Yg + 1e-7
    Px = p / Yg_
    Px_log = jnp.log(Px + 1e-10)
    zerohot = 1.0 - jax.nn.one_hot(y, C, dtype=p.dtype)
    out = Px * Px_log * zerohot
    return jnp.sum(out) / float(B) / float(NUM_CLASSES)


if __name__ == "__main__":
    key = jax.random.PRNGKey(0)
    k1, k2, k3, k4 = jax.random.split(key, 4)

    # Case 1: small batch, single (partial) tile.
    B = 6
    yhat = jax.random.normal(k1, (B, NUM_CLASSES), dtype=jnp.float32)
    y = jax.random.randint(k2, (B,), 0, NUM_CLASSES, dtype=jnp.int32)
    loss = jax.block_until_ready(complement_entropy(yhat, y))
    ref = jax.block_until_ready(_reference(yhat, y))
    assert jnp.allclose(loss, ref, rtol=5e-5, atol=1e-6), (loss, ref)

    # Case 2: multiple tiles with a partial last tile (grid > 1, per-tile
    # label blocks, row masking all exercised).
    B2 = 20
    yhat2 = jax.random.normal(k3, (B2, NUM_CLASSES), dtype=jnp.float32)
    y2 = jax.random.randint(k4, (B2,), 0, NUM_CLASSES, dtype=jnp.int32)
    loss2 = jax.block_until_ready(complement_entropy(yhat2, y2, block_rows=8))
    ref2 = jax.block_until_ready(_reference(yhat2, y2))
    assert jnp.allclose(loss2, ref2, rtol=5e-5, atol=1e-6), (loss2, ref2)

    # Case 3: bf16 logits fed straight through (kernel casts to f32 on load).
    yhat3 = yhat2.astype(jnp.bfloat16)
    loss3 = jax.block_until_ready(complement_entropy(yhat3, y2))
    ref3 = jax.block_until_ready(_reference(yhat3, y2))
    assert jnp.allclose(loss3, ref3, rtol=5e-5, atol=1e-6), (loss3, ref3)

    print("KERNEL_OK")
</pallas_src>

<mosaic_0001>
module attributes {stable_mosaic.version = 11 : i64} {
  func.func @_complement_entropy_kernel(%arg0: i32, %arg1: memref<8x702xf32, #tpu.memory_space<vmem>>, %arg2: memref<8x1xi32, #tpu.memory_space<vmem>>, %arg3: memref<8x1xf32, #tpu.memory_space<vmem>>) attributes {dimension_semantics = [#tpu.dimension_semantics<parallel>], iteration_bounds = array<i64: 1>, scalar_prefetch = 0 : i64, scratch_operands = 0 : i64, tpu.core_type = #tpu.core_type<tc>, window_params = [{transform_indices = @transform_0, window_bounds = array<i64: 8, 702>}, {transform_indices = @transform_1, window_bounds = array<i64: 8, 1>}, {transform_indices = @transform_2, window_bounds = array<i64: 8, 1>}]} {
    %c0 = arith.constant 0 : index
    %c0_0 = arith.constant 0 : index
    %0 = vector.load %arg1[%c0, %c0_0] : memref<8x702xf32, #tpu.memory_space<vmem>>, vector<8x702xf32>
    %c0_1 = arith.constant 0 : index
    %c0_2 = arith.constant 0 : index
    %1 = vector.load %arg2[%c0_1, %c0_2] : memref<8x1xi32, #tpu.memory_space<vmem>>, vector<8x1xi32>
    %cst = arith.constant dense<0xFF800000> : vector<8xf32>
    %2 = vector.multi_reduction <maximumf>, %0, %cst [1] : vector<8x702xf32> to vector<8xf32>
    %3 = vector.shape_cast %2 : vector<8xf32> to vector<8x1xf32>
    %4 = vector.broadcast %3 : vector<8x1xf32> to vector<8x702xf32>
    %5 = arith.subf %0, %4 : vector<8x702xf32>
    %6 = math.exp %5 : vector<8x702xf32>
    %cst_3 = arith.constant dense<0.000000e+00> : vector<8xf32>
    %7 = vector.multi_reduction <add>, %6, %cst_3 [1] : vector<8x702xf32> to vector<8xf32>
    %8 = vector.shape_cast %7 : vector<8xf32> to vector<8x1xf32>
    %9 = tpu.iota {dimensions = array<i32: 1>} : vector<8x702xi32>
    %10 = vector.broadcast %1 : vector<8x1xi32> to vector<8x702xi32>
    %11 = arith.cmpi eq, %9, %10 : vector<8x702xi32>
    %cst_4 = arith.constant 0.000000e+00 : f32
    %12 = vector.broadcast %cst_4 : f32 to vector<8x702xf32>
    %13 = arith.select %11, %6, %12 : vector<8x702xi1>, vector<8x702xf32>
    %cst_5 = arith.constant dense<0.000000e+00> : vector<8xf32>
    %14 = vector.multi_reduction <add>, %13, %cst_5 [1] : vector<8x702xf32> to vector<8xf32>
    %15 = vector.shape_cast %14 : vector<8xf32> to vector<8x1xf32>
    %16 = arith.mulf %6, %5 : vector<8x702xf32>
    %cst_6 = arith.constant dense<0.000000e+00> : vector<8xf32>
    %17 = vector.multi_reduction <add>, %16, %cst_6 [1] : vector<8x702xf32> to vector<8xf32>
    %18 = vector.shape_cast %17 : vector<8xf32> to vector<8x1xf32>
    %19 = tpu.reciprocal %8 : vector<8x1xf32> -> vector<8x1xf32>
    %20 = arith.mulf %15, %19 : vector<8x1xf32>
    %cst_7 = arith.constant 1.000000e+00 : f32
    %21 = vector.broadcast %cst_7 : f32 to vector<8x1xf32>
    %22 = arith.subf %21, %20 : vector<8x1xf32>
    %cst_8 = arith.constant 1.000000e-07 : f32
    %23 = vector.broadcast %cst_8 : f32 to vector<8x1xf32>
    %24 = arith.addf %22, %23 : vector<8x1xf32>
    %25 = tpu.reciprocal %24 : vector<8x1xf32> -> vector<8x1xf32>
    %26 = arith.mulf %19, %25 : vector<8x1xf32>
    %27 = math.log %8 : vector<8x1xf32>
    %28 = math.log %24 : vector<8x1xf32>
    %29 = arith.addf %27, %28 : vector<8x1xf32>
    %cst_9 = arith.constant 0.000000e+00 : f32
    %30 = vector.broadcast %cst_9 : f32 to vector<8x1xf32>
    %31 = arith.cmpf ogt, %15, %30 : vector<8x1xf32>
    %32 = math.log %15 : vector<8x1xf32>
    %33 = arith.mulf %15, %32 : vector<8x1xf32>
    %cst_10 = arith.constant 0.000000e+00 : f32
    %34 = vector.broadcast %cst_10 : f32 to vector<8x1xf32>
    %35 = arith.select %31, %33, %34 : vector<8x1xi1>, vector<8x1xf32>
    %36 = arith.subf %18, %35 : vector<8x1xf32>
    %37 = arith.mulf %26, %36 : vector<8x1xf32>
    %cst_11 = arith.constant 1.000000e+00 : f32
    %38 = vector.broadcast %cst_11 : f32 to vector<8x1xf32>
    %39 = arith.subf %38, %20 : vector<8x1xf32>
    %40 = arith.mulf %29, %39 : vector<8x1xf32>
    %41 = arith.mulf %40, %25 : vector<8x1xf32>
    %42 = arith.subf %37, %41 : vector<8x1xf32>
    %43 = tpu.iota {dimensions = array<i32: 0>} : vector<8x1xi32>
    %c8_i32 = arith.constant 8 : i32
    %44 = arith.muli %arg0, %c8_i32 : i32
    %45 = vector.broadcast %44 : i32 to vector<8x1xi32>
    %46 = arith.addi %43, %45 : vector<8x1xi32>
    %c6_i32 = arith.constant 6 : i32
    %47 = vector.broadcast %c6_i32 : i32 to vector<8x1xi32>
    %48 = arith.cmpi slt, %46, %47 : vector<8x1xi32>
    %cst_12 = arith.constant 0.000000e+00 : f32
    %49 = vector.broadcast %cst_12 : f32 to vector<8x1xf32>
    %50 = arith.select %48, %42, %49 : vector<8x1xi1>, vector<8x1xf32>
    %c0_13 = arith.constant 0 : index
    %c0_14 = arith.constant 0 : index
    %51 = vector.load %arg3[%c0_13, %c0_14] : memref<8x1xf32, #tpu.memory_space<vmem>>, vector<8x1xf32>
    tpu.vector_store %arg3[%c0_13, %c0_14], %50 {strides = array<i32>} : memref<8x1xf32, #tpu.memory_space<vmem>>, vector<8x1xf32>,
    return
  }
  func.func @transform_0(%arg0: i32) -> (i32, i32) {
    %c0_i32 = arith.constant 0 : i32
    %c0_i32_0 = arith.constant 0 : i32
    return %arg0, %c0_i32 : i32, i32
  }
  func.func @transform_1(%arg0: i32) -> (i32, i32) {
    %c0_i32 = arith.constant 0 : i32
    %c0_i32_0 = arith.constant 0 : i32
    return %arg0, %c0_i32 : i32, i32
  }
  func.func @transform_2(%arg0: i32) -> (i32, i32) {
    %c0_i32 = arith.constant 0 : i32
    %c0_i32_0 = arith.constant 0 : i32
    return %arg0, %c0_i32 : i32, i32
  }
}

</mosaic_0001>

<llo_original>
// kernel: tpu_custom_call.1
$region0: #{tpu_custom_call.1}
  #allocation0 [shape = 'u32[]', space=smem, size = 0x4, offset = 0x4, fixed_abs, tag = 'smem constant byte address 0x4 - core index']
  #allocation1 [shape = 'u32[144,128]{1,0:T(1,128)}', space=vmem, size = 0x12000, scoped, tag = 'internal scratch']
  %s0 = inlined_call_operand.hbm [shape: f32[6,702], index: 0, kind: input, shape index: {}]
  %s1 = inlined_call_operand.vmem [shape: s32[8,1], index: 1, kind: input, shape index: {}]
  %s2 = inlined_call_operand.vmem [shape: f32[8,1], index: 2, kind: output, shape index: {}]
  %s3 = sld [smem:[#allocation0]]
  $region22: #{tpu_custom_call.1} parent=0
    _
  %s5 = ssub.s32 1, %s3
  %s6 = scalar_select 0, %s5, %s3
  $region1: #{tpu_custom_call.1} parent=0
    #allocation2 [shape = 'u8[24576]{0}', space=vmem, size = 0x6000, scoped, tag = 'input window, operand 0, single buffered']
    #allocation3 [shape = 's32[1]{0}', space=sflag, size = 0x4, scoped, tag = 'scoped memory for tpu_custom_call.1']
    %7 = vsyncpa [#allocation3], 0
    // Predicated region
    $region2: #{tpu_custom_call.1} parent=1 // pred_check
      _
    $region3: #{tpu_custom_call.1} parent=1 // pred_check_branch
      %9 = sbr.rel (0) target = $region5
    $region4: #{tpu_custom_call.1} parent=1 // pred_region
      %s11 = ssub.s32 768, 768
      %12 = vsyncadd [#allocation3], %s11
      %s14 = sshll.u32 [#allocation2], 4
      %s15 = int_to_ptr.vmem [resolvable:$true] %s14
      %17 = dma.hbm_to_vmem [thread:$0]  %s0, 768, %s15, [#allocation3]
    $region5: #{tpu_custom_call.1} parent=1 // pred_fallthru
      _
    // Predicated region
    $region6: #{tpu_custom_call.1} parent=1 // pred_check
      _
    $region7: #{tpu_custom_call.1} parent=1 // pred_check_branch
      %19 = sbr.rel (0) target = $region9
    $region8: #{tpu_custom_call.1} parent=1 // pred_region
      _
    $region9: #{tpu_custom_call.1} parent=1 // pred_fallthru
      _
    // Predicated region
    $region10: #{tpu_custom_call.1} parent=1 // pred_check
      _
    $region11: #{tpu_custom_call.1} parent=1 // pred_check_branch
      %21 = sbr.rel (0) target = $region13
    $region12: #{tpu_custom_call.1} parent=1 // pred_region
      %22 = dma.done [#allocation3], 768
    $region13: #{tpu_custom_call.1} parent=1 // pred_fallthru
      _
    %v23 = vld [vmem:[#allocation2] sm:$0xff]
    %v24 = vld [vmem:[#allocation2 + $0x8] sm:$0xff]
    %v25 = vld [vmem:[#allocation2 + $0x10] sm:$0xff]
    %v26 = vld [vmem:[#allocation2 + $0x18] sm:$0xff]
    %v27 = vld [vmem:[#allocation2 + $0x20] sm:$0xff]
    %v28 = vld [vmem:[#allocation2 + $0x28] sm:$0xff]
    %v29 = vld [vmem:[%s1] sm:$0xff]
    %v30 = vmax.f32 %v23, %v27
    %vm31 = vcmask 506880
    %v32 = vsel %vm31, %v28, -inf
    %v33 = vmax.f32 %v24, %v32
    %v34 = vmax.f32 %v30, %v33
    %v35 = vmax.f32 %v25, %v26
    %v36 = vmax.f32 %v34, %v35
    %37 = vmax.xlane.f32.xlu0 %v36
    %v38 = vpop.xlane.xlu0 %37
    %v39 = vsub.f32 %v23, %v38
    %v40 = vsub.f32 %v24, %v38
    %v41 = vsub.f32 %v25, %v38
    %v42 = vsub.f32 %v26, %v38
    %v43 = vsub.f32 %v27, %v38
    %v44 = vsub.f32 %v28, %v38
    %v45 = vmul.f32 %v39, 1.442695
    %v46 = vpow.pop %v45
    %v47 = vmul.f32 %v40, 1.442695
    %v48 = vpow.pop %v47
    %v49 = vmul.f32 %v41, 1.442695
    %v50 = vpow.pop %v49
    %v51 = vmul.f32 %v42, 1.442695
    %v52 = vpow.pop %v51
    %v53 = vmul.f32 %v43, 1.442695
    %v54 = vpow.pop %v53
    %v55 = vmul.f32 %v44, 1.442695
    %v56 = vpow.pop %v55
    %v57 = vadd.f32 %v46, %v48
    %v58 = vadd.f32 %v57, %v50
    %v59 = vadd.f32 %v58, %v52
    %v60 = vadd.f32 %v59, %v54
    %v61 = vsel %vm31, %v56, 0.0
    %v62 = vadd.f32 %v60, %v61
    %63 = vadd.xlane.f32.xlu0 %v62
    %v64 = vpop.xlane.xlu0 %63
    %v65 = vlaneseq
    %v66 = vand.u32 %v65, 127
    %v67 = vadd.s32 %v66, 128
    %v68 = vadd.s32 %v66, 256
    %v69 = vadd.s32 %v66, 384
    %v70 = vadd.s32 %v66, 512
    %v71 = vadd.s32 %v66, 640
    %72 = vset.pattern.permute.xlu0 0
    %73 = vperm.xlu0 %72, %v29
    %v74 = vpop.permute.xlu0 %73
    %vm75 = vcmp.eq.s32.totalorder %v66, %v74
    %vm76 = vcmp.eq.s32.totalorder %v67, %v74
    %vm77 = vcmp.eq.s32.totalorder %v68, %v74
    %vm78 = vcmp.eq.s32.totalorder %v69, %v74
    %vm79 = vcmp.eq.s32.totalorder %v70, %v74
    %vm80 = vcmp.eq.s32.totalorder %v71, %v74
    %v81 = vsel %vm75, %v46, 0.0
    %v82 = vsel %vm76, %v48, 0.0
    %v83 = vsel %vm77, %v50, 0.0
    %v84 = vsel %vm78, %v52, 0.0
    %v85 = vsel %vm79, %v54, 0.0
    %v86 = vsel %vm80, %v56, 0.0
    %v87 = vadd.f32 %v81, %v82
    %v88 = vadd.f32 %v87, %v83
    %v89 = vadd.f32 %v88, %v84
    %v90 = vadd.f32 %v89, %v85
    %v91 = vsel %vm31, %v86, 0.0
    %v92 = vadd.f32 %v90, %v91
    %93 = vadd.xlane.f32.xlu0 %v92
    %v94 = vpop.xlane.xlu0 %93
    %v95 = vmul.f32 %v46, %v39
    %v96 = vmul.f32 %v48, %v40
    %v97 = vmul.f32 %v50, %v41
    %v98 = vmul.f32 %v52, %v42
    %v99 = vmul.f32 %v54, %v43
    %v100 = vmul.f32 %v56, %v44
    %v101 = vadd.f32 %v95, %v96
    %v102 = vadd.f32 %v101, %v97
    %v103 = vadd.f32 %v102, %v98
    %v104 = vadd.f32 %v103, %v99
    %v105 = vsel %vm31, %v100, 0.0
    %v106 = vadd.f32 %v104, %v105
    %107 = vadd.xlane.f32.xlu0 %v106
    %v108 = vpop.xlane.xlu0 %107
    %v109 = vrcp.pop %v64
    %v110 = vmul.f32 %v94, %v109
    %v111 = vsub.f32 1.0, %v110
    %v112 = vadd.f32 %v111, 1e-07
    %v113 = vrcp.pop %v112
    %v114 = vmul.f32 %v109, %v113
    %v115 = vlog2.pop %v64
    %v116 = vmul.f32 %v115, 0.6931472
    %v117 = vlog2.pop %v112
    %v118 = vmul.f32 %v117, 0.6931472
    %v119 = vadd.f32 %v116, %v118
    %vm120 = vcmp.gt.f32.partialorder %v94, 0.0
    %v121 = vlog2.pop %v94
    %v122 = vmul.f32 %v121, 0.6931472
    %v123 = vmul.f32 %v94, %v122
    %v124 = vsel %vm120, %v123, 0.0
    %v125 = vsub.f32 %v108, %v124
    %v126 = vmul.f32 %v114, %v125
    %v127 = vmul.f32 %v119, %v111
    %v128 = vmul.f32 %v127, %v113
    %v129 = vsub.f32 %v126, %v128
    %v130 = vlaneseq
    %v131 = vshrl.u32 %v130, 7
    %s132 = smul.u32 0, 8
    %v133 = vstv %s132
    %v134 = vadd.s32 %v131, %v133
    %vm135 = vcmp.lt.s32.totalorder %v134, 6
    %v136 = vsel %vm135, %v129, 0.0
    %vm137 = vcmask 7168
    %138 = vst.msk [vmem:[%s2] sm:$0xff] %vm137, %v136
    // Predicated region
    $region14: #{tpu_custom_call.1} parent=1 // pred_check
      _
    $region15: #{tpu_custom_call.1} parent=1 // pred_check_branch
      %140 = sbr.rel (0) target = $region17
    $region16: #{tpu_custom_call.1} parent=1 // pred_region
      _
    $region17: #{tpu_custom_call.1} parent=1 // pred_fallthru
      _
    // Predicated region
    $region18: #{tpu_custom_call.1} parent=1 // pred_check
      _
    $region19: #{tpu_custom_call.1} parent=1 // pred_check_branch
      %142 = sbr.rel (0) target = $region21
    $region20: #{tpu_custom_call.1} parent=1 // pred_region
      _
    $region21: #{tpu_custom_call.1} parent=1 // pred_fallthru
      _
    %143 = vsyncpa [#allocation3], 1

</llo_original>
